<compile_context>
chip_gen: v7x
topology: tpu7x:2x2x1
jax: 0.10.0
libtpu: 0.0.40
codegen_flags: <defaults>
</compile_context>

<pallas_src>
import math

import jax
import jax.numpy as jnp
from jax.experimental import pallas as pl
from jax.experimental.pallas import tpu as pltpu

N_EMBD = 64
HIDDEN = int(4.2 * N_EMBD)  # 268


def _round_up(v, m):
    return ((v + m - 1) // m) * m


def _ffwd_kernel(x_ref, w1_ref, b1_ref, w2_ref, b2_ref, o_ref):
    # x_ref : (TM, C) f32      w1_ref : (C, Hp) bf16   b1_ref : (1, Hp) f32
    # w2_ref: (Hp, C) bf16     b2_ref : (1, C)  f32    o_ref  : (TM, C) f32
    x = x_ref[...].astype(jnp.bfloat16)                       # bf16 MXU operand
    h = jnp.dot(x, w1_ref[...], preferred_element_type=jnp.float32) + b1_ref[...]
    h = jnp.maximum(h, 0.0)                                   # ReLU in f32
    o = jnp.dot(h.astype(jnp.bfloat16), w2_ref[...],
                preferred_element_type=jnp.float32) + b2_ref[...]
    o_ref[...] = o.astype(o_ref.dtype)                        # Dropout(eval) = identity


def prepare_params(w1, b1, w2, b2):
    """One-time parameter prep (NOT in the per-call hot path).

    Zero-pads the hidden dim to a multiple of 128 (numerically exact) and
    pre-casts the matmul weights to bfloat16.  Biases stay f32 (added to the
    f32 accumulators inside the kernel).
    """
    C, H = w1.shape
    Hp = _round_up(H, 128)
    if Hp != H:
        w1 = jnp.pad(w1, ((0, 0), (0, Hp - H)))   # pad output columns with 0
        b1 = jnp.pad(b1, ((0, Hp - H),))          # pad bias with 0
        w2 = jnp.pad(w2, ((0, Hp - H), (0, 0)))   # pad contraction rows with 0
    return (w1.astype(jnp.bfloat16),
            b1.reshape(1, Hp).astype(jnp.float32),
            w2.astype(jnp.bfloat16),
            b2.reshape(1, C).astype(jnp.float32))


def feedforward_pallas(x, w1p, b1p, w2p, b2p, *, tm_target=4096):
    """x: (B, T, n_embd) float32 -> (B, T, n_embd) float32.

    w1p/b1p/w2p/b2p must come from `prepare_params` (padded, bf16 weights).
    """
    B, T, C = x.shape
    Hp = w1p.shape[1]
    M = B * T

    # ---- tile the token dimension.
    # Cap TM at ceil(M/2) so the grid has >=2 steps whenever possible, so the
    # "parallel" axis can be sharded across both TensorCores on v7x.
    x2d = x.reshape(M, C)
    TM = min(tm_target, max(8, _round_up(-(-M // 2), 8)))   # sublane-aligned
    Mp = _round_up(M, TM)
    if Mp != M:
        x2d = jnp.pad(x2d, ((0, Mp - M), (0, 0)))

    grid = (Mp // TM,)

    # Advisory cost hint for XLA scheduling around the custom call.
    flops = 4 * Mp * Hp * C                                   # two matmuls
    bytes_accessed = (Mp * C * 4 * 2                          # x in + out (f32)
                      + (C * Hp + Hp * C) * 2                 # bf16 weights
                      + (Hp + C) * 4)                         # f32 biases
    cost = pl.CostEstimate(flops=flops, transcendentals=0,
                           bytes_accessed=bytes_accessed)

    out2d = pl.pallas_call(
        _ffwd_kernel,
        out_shape=jax.ShapeDtypeStruct((Mp, C), x.dtype),
        grid_spec=pltpu.PrefetchScalarGridSpec(
            num_scalar_prefetch=0,
            grid=grid,
            in_specs=[
                pl.BlockSpec((TM, C), lambda i: (i, 0)),   # x tile (pipelined)
                pl.BlockSpec((C, Hp), lambda i: (0, 0)),   # w1 (VMEM-resident)
                pl.BlockSpec((1, Hp), lambda i: (0, 0)),   # b1 (resident)
                pl.BlockSpec((Hp, C), lambda i: (0, 0)),   # w2 (resident)
                pl.BlockSpec((1, C), lambda i: (0, 0)),    # b2 (resident)
            ],
            out_specs=pl.BlockSpec((TM, C), lambda i: (i, 0)),
        ),
        compiler_params=pltpu.CompilerParams(
            dimension_semantics=("parallel",),             # megacore / dual-TC shard
            vmem_limit_bytes=48 << 20,
        ),
        cost_estimate=cost,
    )(x2d, w1p, b1p, w2p, b2p)

    return out2d[:M].reshape(B, T, C)


def init_params(key, n_embd=N_EMBD, hidden=HIDDEN):
    """Deterministic init mimicking nn.Linear defaults (U(-1/sqrt(fan_in), +))."""
    k1, k2, k3, k4 = jax.random.split(key, 4)
    lim1 = 1.0 / math.sqrt(n_embd)
    lim2 = 1.0 / math.sqrt(hidden)
    w1 = jax.random.uniform(k1, (n_embd, hidden), jnp.float32, -lim1, lim1)
    b1 = jax.random.uniform(k2, (hidden,), jnp.float32, -lim1, lim1)
    w2 = jax.random.uniform(k3, (hidden, n_embd), jnp.float32, -lim2, lim2)
    b2 = jax.random.uniform(k4, (n_embd,), jnp.float32, -lim2, lim2)
    return w1, b1, w2, b2


if __name__ == "__main__":
    key = jax.random.PRNGKey(0)
    kx, kp = jax.random.split(key)

    B, T = 2, 8
    x = jax.random.normal(kx, (B, T, N_EMBD), jnp.float32)
    w1, b1, w2, b2 = init_params(kp)

    # One-time parameter prep (padding + bf16 cast), outside the hot path.
    params = prepare_params(w1, b1, w2, b2)

    out = feedforward_pallas(x, *params)
    out = jax.block_until_ready(out)

    # Pure-JAX f32 reference (dropout in eval mode = identity).  The kernel
    # uses bf16 MXU operands with f32 accumulation, so compare at bf16-level
    # tolerance rather than claiming bit-exact f32 parity.
    ref = jnp.maximum(x @ w1 + b1, 0.0) @ w2 + b2
    assert out.shape == (B, T, N_EMBD)
    assert jnp.allclose(out, ref, atol=2e-2, rtol=2e-2)

    print("KERNEL_OK")
</pallas_src>

<mosaic_0001>
module attributes {stable_mosaic.version = 11 : i64} {
  func.func @_ffwd_kernel(%arg0: i32, %arg1: memref<8x64xf32, #tpu.memory_space<vmem>>, %arg2: memref<64x384xbf16, #tpu.memory_space<vmem>>, %arg3: memref<1x384xf32, #tpu.memory_space<vmem>>, %arg4: memref<384x64xbf16, #tpu.memory_space<vmem>>, %arg5: memref<1x64xf32, #tpu.memory_space<vmem>>, %arg6: memref<8x64xf32, #tpu.memory_space<vmem>>) attributes {dimension_semantics = [#tpu.dimension_semantics<parallel>], iteration_bounds = array<i64: 2>, scalar_prefetch = 0 : i64, scratch_operands = 0 : i64, tpu.core_type = #tpu.core_type<tc>, window_params = [{transform_indices = @transform_0, window_bounds = array<i64: 8, 64>}, {pipeline_mode = #tpu.pipeline_mode<synchronous>, transform_indices = @transform_1, window_bounds = array<i64: 64, 384>}, {pipeline_mode = #tpu.pipeline_mode<synchronous>, transform_indices = @transform_2, window_bounds = array<i64: 1, 384>}, {pipeline_mode = #tpu.pipeline_mode<synchronous>, transform_indices = @transform_3, window_bounds = array<i64: 384, 64>}, {pipeline_mode = #tpu.pipeline_mode<synchronous>, transform_indices = @transform_4, window_bounds = array<i64: 1, 64>}, {transform_indices = @transform_5, window_bounds = array<i64: 8, 64>}]} {
    %c0 = arith.constant 0 : index
    %c0_0 = arith.constant 0 : index
    %0 = vector.load %arg1[%c0, %c0_0] : memref<8x64xf32, #tpu.memory_space<vmem>>, vector<8x64xf32>
    %1 = arith.truncf %0 : vector<8x64xf32> to vector<8x64xbf16>
    %c0_1 = arith.constant 0 : index
    %c0_2 = arith.constant 0 : index
    %2 = vector.load %arg2[%c0_1, %c0_2] : memref<64x384xbf16, #tpu.memory_space<vmem>>, vector<64x384xbf16>
    %cst = arith.constant dense<0.000000e+00> : vector<8x384xf32>
    %3 = tpu.matmul %1, %2, %cst {dimension_numbers = #tpu.dot_dimension_numbers<[1], [0], [0], [1], [0, 0, 1, 1], [], []>} : vector<8x64xbf16>, vector<64x384xbf16>, vector<8x384xf32> -> vector<8x384xf32>
    %c0_3 = arith.constant 0 : index
    %c0_4 = arith.constant 0 : index
    %4 = vector.load %arg3[%c0_3, %c0_4] : memref<1x384xf32, #tpu.memory_space<vmem>>, vector<1x384xf32>
    %5 = vector.broadcast %4 : vector<1x384xf32> to vector<8x384xf32>
    %6 = arith.addf %3, %5 : vector<8x384xf32>
    %cst_5 = arith.constant 0.000000e+00 : f32
    %7 = vector.broadcast %cst_5 : f32 to vector<8x384xf32>
    %8 = arith.maximumf %6, %7 : vector<8x384xf32>
    %9 = arith.truncf %8 : vector<8x384xf32> to vector<8x384xbf16>
    %c0_6 = arith.constant 0 : index
    %c0_7 = arith.constant 0 : index
    %10 = vector.load %arg4[%c0_6, %c0_7] : memref<384x64xbf16, #tpu.memory_space<vmem>>, vector<384x64xbf16>
    %cst_8 = arith.constant dense<0.000000e+00> : vector<8x64xf32>
    %11 = tpu.matmul %9, %10, %cst_8 {dimension_numbers = #tpu.dot_dimension_numbers<[1], [0], [0], [1], [0, 0, 1, 1], [], []>} : vector<8x384xbf16>, vector<384x64xbf16>, vector<8x64xf32> -> vector<8x64xf32>
    %c0_9 = arith.constant 0 : index
    %c0_10 = arith.constant 0 : index
    %12 = vector.load %arg5[%c0_9, %c0_10] : memref<1x64xf32, #tpu.memory_space<vmem>>, vector<1x64xf32>
    %13 = vector.broadcast %12 : vector<1x64xf32> to vector<8x64xf32>
    %14 = arith.addf %11, %13 : vector<8x64xf32>
    %c0_11 = arith.constant 0 : index
    %c0_12 = arith.constant 0 : index
    %15 = vector.load %arg6[%c0_11, %c0_12] : memref<8x64xf32, #tpu.memory_space<vmem>>, vector<8x64xf32>
    tpu.vector_store %arg6[%c0_11, %c0_12], %14 {strides = array<i32>} : memref<8x64xf32, #tpu.memory_space<vmem>>, vector<8x64xf32>,
    return
  }
  func.func @transform_0(%arg0: i32) -> (i32, i32) {
    %c0_i32 = arith.constant 0 : i32
    %c0_i32_0 = arith.constant 0 : i32
    return %arg0, %c0_i32 : i32, i32
  }
  func.func @transform_1(%arg0: i32) -> (i32, i32) {
    %c0_i32 = arith.constant 0 : i32
    %c0_i32_0 = arith.constant 0 : i32
    %c0_i32_1 = arith.constant 0 : i32
    return %c0_i32, %c0_i32_0 : i32, i32
  }
  func.func @transform_2(%arg0: i32) -> (i32, i32) {
    %c0_i32 = arith.constant 0 : i32
    %c0_i32_0 = arith.constant 0 : i32
    %c0_i32_1 = arith.constant 0 : i32
    return %c0_i32, %c0_i32_0 : i32, i32
  }
  func.func @transform_3(%arg0: i32) -> (i32, i32) {
    %c0_i32 = arith.constant 0 : i32
    %c0_i32_0 = arith.constant 0 : i32
    %c0_i32_1 = arith.constant 0 : i32
    return %c0_i32, %c0_i32_0 : i32, i32
  }
  func.func @transform_4(%arg0: i32) -> (i32, i32) {
    %c0_i32 = arith.constant 0 : i32
    %c0_i32_0 = arith.constant 0 : i32
    %c0_i32_1 = arith.constant 0 : i32
    return %c0_i32, %c0_i32_0 : i32, i32
  }
  func.func @transform_5(%arg0: i32) -> (i32, i32) {
    %c0_i32 = arith.constant 0 : i32
    %c0_i32_0 = arith.constant 0 : i32
    return %arg0, %c0_i32 : i32, i32
  }
}

</mosaic_0001>

<llo_original>
// kernel: tpu_custom_call.1
$region0: #{tpu_custom_call.1}
  #allocation0 [shape = 'u32[]', space=smem, size = 0x4, offset = 0x4, fixed_abs, tag = 'smem constant byte address 0x4 - core index']
  #allocation1 [shape = 'u32[144,128]{1,0:T(1,128)}', space=vmem, size = 0x12000, scoped, tag = 'internal scratch']
  %s0 = inlined_call_operand.vmem [shape: f32[16,64], index: 0, kind: input, shape index: {}]
  %s1 = inlined_call_operand.vmem [shape: bf16[64,384], index: 1, kind: input, shape index: {}]
  %s2 = inlined_call_operand.vmem [shape: f32[1,384], index: 2, kind: input, shape index: {}]
  %s3 = inlined_call_operand.vmem [shape: bf16[384,64], index: 3, kind: input, shape index: {}]
  %s4 = inlined_call_operand.vmem [shape: f32[1,64], index: 4, kind: input, shape index: {}]
  %s5 = inlined_call_operand.hbm [shape: f32[16,64], index: 5, kind: output, shape index: {}]
  %s6 = sld [smem:[#allocation0]]
  $region53: #{tpu_custom_call.1} parent=0
    _
  %s8 = ssub.s32 1, %s6
  %s9 = scalar_select 0, %s8, %s6
  $region1: #{tpu_custom_call.1} parent=0
    #allocation2 [shape = 'u8[8192]{0}', space=vmem, size = 0x2000, scoped, tag = 'output window, operand 0']
    #allocation3 [shape = 's32[2]{0}', space=sflag, size = 0x8, scoped, tag = 'scoped memory for tpu_custom_call.1']
    %10 = vsyncpa [#allocation3], 0
    %s11 = scalar_lea.sflag [#allocation3], 1
    %12 = vsyncpa %s11, 0
    loop: start=0, step=1, limit=4
    $region2: #{tpu_custom_call.1} parent=1 // loop_pre_header
      _
    $region3: #{tpu_custom_call.1} parent=1 // loop_header
      %s14 = sphi 0, %s18
      %p15 = scmp.ge.s32.totalorder %s14, 4
      %s24 = sphi 0, %s26
      %s27 = sphi 0, %s24
      %s28 = sphi 0, %s27
      %s44 = sphi 0, %s28
      %s48 = sphi 0, %s48
      %s50 = sphi 0, %s48
      %s51 = sphi 0, %s50
      %s65 = sphi 0, %s51
      %s69 = sphi 0, %s69
      %s71 = sphi 0, %s69
      %s72 = sphi 0, %s71
      %s86 = sphi 0, %s72
      %s90 = sphi 0, %s90
      %s92 = sphi 0, %s90
      %s93 = sphi 0, %s92
      %s107 = sphi 0, %s93
      %s111 = sphi 0, %s111
      %s113 = sphi 0, %s111
      %s114 = sphi 0, %s113
      %s128 = sphi 0, %s114
      %s134 = sphi 0, %s136
      %s137 = sphi 0, %s134
      %s138 = sphi 0, %s137
      %s154 = sphi 0, %s138
    $region4: #{tpu_custom_call.1} parent=1 // loop_header_branch
      %17 = sbr.rel (%p15) target = $region8
    $region5: #{tpu_custom_call.1} parent=1 // loop_body
      %s19 = ssub.s32 %s14, 1
      %s20 = ssub.s32 %s14, 2
      %s21 = sadd.s32 %s14, 1
      %s22 = ssub.s32 %s14, %s21
      %p23 = scmp.eq.s32.totalorder %s22, 0
      %s25 = sadd.s32 %s24, 1
      %s26 = scalar_select %p23, %s24, %s25
      %p29 = pneg %p23
      %p30 = scmp.eq.s32.totalorder %s14, 1
      %p31 = por %p29, %p30
      %p32 = scmp.ne.s32.totalorder %s24, %s27
      %p33 = scmp.eq.s32.totalorder %s14, 0
      %p34 = por %p32, %p33
      %p35 = scmp.ne.s32.totalorder %s24, %s27
      %p36 = scmp.eq.s32.totalorder %s19, 1
      %p37 = por %p35, %p36
      %p38 = scmp.ne.s32.totalorder %s27, %s28
      %p39 = scmp.eq.s32.totalorder %s19, 0
      %p40 = por %p38, %p39
      %p41 = scmp.ne.s32.totalorder %s27, %s28
      %p42 = scmp.eq.s32.totalorder %s20, 1
      %p43 = por %p41, %p42
      %p45 = scmp.ne.s32.totalorder %s28, %s44
      %p46 = scmp.eq.s32.totalorder %s20, 0
      %p47 = por %p45, %p46
      %s49 = sadd.s32 %s48, 1
      %p52 = scmp.eq.s32.totalorder %s14, 1
      %p53 = scmp.ne.s32.totalorder %s48, %s50
      %p54 = scmp.eq.s32.totalorder %s14, 0
      %p55 = por %p53, %p54
      %p56 = scmp.ne.s32.totalorder %s48, %s50
      %p57 = scmp.eq.s32.totalorder %s19, 1
      %p58 = por %p56, %p57
      %p59 = scmp.ne.s32.totalorder %s50, %s51
      %p60 = scmp.eq.s32.totalorder %s19, 0
      %p61 = por %p59, %p60
      %p62 = scmp.ne.s32.totalorder %s50, %s51
      %p63 = scmp.eq.s32.totalorder %s20, 1
      %p64 = por %p62, %p63
      %p66 = scmp.ne.s32.totalorder %s51, %s65
      %p67 = scmp.eq.s32.totalorder %s20, 0
      %p68 = por %p66, %p67
      %s70 = sadd.s32 %s69, 1
      %p73 = scmp.eq.s32.totalorder %s14, 1
      %p74 = scmp.ne.s32.totalorder %s69, %s71
      %p75 = scmp.eq.s32.totalorder %s14, 0
      %p76 = por %p74, %p75
      %p77 = scmp.ne.s32.totalorder %s69, %s71
      %p78 = scmp.eq.s32.totalorder %s19, 1
      %p79 = por %p77, %p78
      %p80 = scmp.ne.s32.totalorder %s71, %s72
      %p81 = scmp.eq.s32.totalorder %s19, 0
      %p82 = por %p80, %p81
      %p83 = scmp.ne.s32.totalorder %s71, %s72
      %p84 = scmp.eq.s32.totalorder %s20, 1
      %p85 = por %p83, %p84
      %p87 = scmp.ne.s32.totalorder %s72, %s86
      %p88 = scmp.eq.s32.totalorder %s20, 0
      %p89 = por %p87, %p88
      %s91 = sadd.s32 %s90, 1
      %p94 = scmp.eq.s32.totalorder %s14, 1
      %p95 = scmp.ne.s32.totalorder %s90, %s92
      %p96 = scmp.eq.s32.totalorder %s14, 0
      %p97 = por %p95, %p96
      %p98 = scmp.ne.s32.totalorder %s90, %s92
      %p99 = scmp.eq.s32.totalorder %s19, 1
      %p100 = por %p98, %p99
      %p101 = scmp.ne.s32.totalorder %s92, %s93
      %p102 = scmp.eq.s32.totalorder %s19, 0
      %p103 = por %p101, %p102
      %p104 = scmp.ne.s32.totalorder %s92, %s93
      %p105 = scmp.eq.s32.totalorder %s20, 1
      %p106 = por %p104, %p105
      %p108 = scmp.ne.s32.totalorder %s93, %s107
      %p109 = scmp.eq.s32.totalorder %s20, 0
      %p110 = por %p108, %p109
      %s112 = sadd.s32 %s111, 1
      %p115 = scmp.eq.s32.totalorder %s14, 1
      %p116 = scmp.ne.s32.totalorder %s111, %s113
      %p117 = scmp.eq.s32.totalorder %s14, 0
      %p118 = por %p116, %p117
      %p119 = scmp.ne.s32.totalorder %s111, %s113
      %p120 = scmp.eq.s32.totalorder %s19, 1
      %p121 = por %p119, %p120
      %p122 = scmp.ne.s32.totalorder %s113, %s114
      %p123 = scmp.eq.s32.totalorder %s19, 0
      %p124 = por %p122, %p123
      %p125 = scmp.ne.s32.totalorder %s113, %s114
      %p126 = scmp.eq.s32.totalorder %s20, 1
      %p127 = por %p125, %p126
      %p129 = scmp.ne.s32.totalorder %s114, %s128
      %p130 = scmp.eq.s32.totalorder %s20, 0
      %p131 = por %p129, %p130
      %s132 = ssub.s32 %s14, %s21
      %p133 = scmp.eq.s32.totalorder %s132, 0
      %s135 = sadd.s32 %s134, 1
      %s136 = scalar_select %p133, %s134, %s135
      %p139 = pneg %p133
      %p140 = scmp.eq.s32.totalorder %s14, 1
      %p141 = por %p139, %p140
      %p142 = scmp.ne.s32.totalorder %s134, %s137
      %p143 = scmp.eq.s32.totalorder %s14, 0
      %p144 = por %p142, %p143
      %p145 = scmp.ne.s32.totalorder %s134, %s137
      %p146 = scmp.eq.s32.totalorder %s19, 1
      %p147 = por %p145, %p146
      %p148 = scmp.ne.s32.totalorder %s137, %s138
      %p149 = scmp.eq.s32.totalorder %s19, 0
      %p150 = por %p148, %p149
      %p151 = scmp.ne.s32.totalorder %s137, %s138
      %p152 = scmp.eq.s32.totalorder %s20, 1
      %p153 = por %p151, %p152
      %p155 = scmp.ne.s32.totalorder %s138, %s154
      %p156 = scmp.eq.s32.totalorder %s20, 0
      %p157 = por %p155, %p156
      %p158 = scmp.le.s32.totalorder 1, %s14
      %p159 = scmp.lt.s32.totalorder %s14, 3
      %p160 = pnand %p158, %p159
      %p161 = pneg %p160
      // Predicated region
      $region9: #{tpu_custom_call.1} parent=5 // pred_check
        _
      $region10: #{tpu_custom_call.1} parent=5 // pred_check_branch
        %163 = sbr.rel (%p160) target = $region12
      $region11: #{tpu_custom_call.1} parent=5 // pred_region
        %s164 = ssub.s32 %s14, 1
        // Predicated region
        $region13: #{tpu_custom_call.1} parent=11 // pred_check
          %p165 = pneg %p61
        $region14: #{tpu_custom_call.1} parent=11 // pred_check_branch
          %167 = sbr.rel (%p165) target = $region16
        $region15: #{tpu_custom_call.1} parent=11 // pred_region
          _
        $region16: #{tpu_custom_call.1} parent=11 // pred_fallthru
          _
        // Predicated region
        $region17: #{tpu_custom_call.1} parent=11 // pred_check
          %p168 = pneg %p82
        $region18: #{tpu_custom_call.1} parent=11 // pred_check_branch
          %170 = sbr.rel (%p168) target = $region20
        $region19: #{tpu_custom_call.1} parent=11 // pred_region
          _
        $region20: #{tpu_custom_call.1} parent=11 // pred_fallthru
          _
        // Predicated region
        $region21: #{tpu_custom_call.1} parent=11 // pred_check
          %p171 = pneg %p103
        $region22: #{tpu_custom_call.1} parent=11 // pred_check_branch
          %173 = sbr.rel (%p171) target = $region24
        $region23: #{tpu_custom_call.1} parent=11 // pred_region
          _
        $region24: #{tpu_custom_call.1} parent=11 // pred_fallthru
          _
        // Predicated region
        $region25: #{tpu_custom_call.1} parent=11 // pred_check
          %p174 = pneg %p124
        $region26: #{tpu_custom_call.1} parent=11 // pred_check_branch
          %176 = sbr.rel (%p174) target = $region28
        $region27: #{tpu_custom_call.1} parent=11 // pred_region
          _
        $region28: #{tpu_custom_call.1} parent=11 // pred_fallthru
          _
      $region12: #{tpu_custom_call.1} parent=5 // pred_fallthru
        _
      %p177 = scmp.lt.s32.totalorder %s14, 2
      // Predicated region
      $region29: #{tpu_custom_call.1} parent=5 // pred_check
        %p178 = pneg %p177
      $region30: #{tpu_custom_call.1} parent=5 // pred_check_branch
        %180 = sbr.rel (%p178) target = $region32
      $region31: #{tpu_custom_call.1} parent=5 // pred_region
        // Predicated region
        $region33: #{tpu_custom_call.1} parent=31 // pred_check
          %p181 = pneg %p34
        $region34: #{tpu_custom_call.1} parent=31 // pred_check_branch
          %183 = sbr.rel (%p181) target = $region36
        $region35: #{tpu_custom_call.1} parent=31 // pred_region
          %p184 = scmp.lt.s32.totalorder %s14, 1
          %s185 = scalar_select %p184, %s14, 1
          %s186 = smul.addr %s185, 8
          %s187 = scalar_lea.vmem %s0, %s186
        $region36: #{tpu_custom_call.1} parent=31 // pred_fallthru
          _
      $region32: #{tpu_custom_call.1} parent=5 // pred_fallthru
        _
      %p188 = scmp.le.s32.totalorder 1, %s14
      %p189 = scmp.lt.s32.totalorder %s14, 3
      %p190 = pnand %p188, %p189
      %p191 = pneg %p190
      // Predicated region
      $region37: #{tpu_custom_call.1} parent=5 // pred_check
        _
      $region38: #{tpu_custom_call.1} parent=5 // pred_check_branch
        %193 = sbr.rel (%p190) target = $region40
      $region39: #{tpu_custom_call.1} parent=5 // pred_region
        %s194 = ssub.s32 %s14, 1
        %p195 = scmp.lt.s32.totalorder %s19, 1
        %s196 = scalar_select %p195, %s19, 1
        %s197 = smul.addr %s196, 8
        %s198 = scalar_lea.vmem %s0, %s197
        %p199 = pneg %p40
        %p200 = pneg %p37
        %p201 = pneg %p61
        %p202 = pneg %p58
        %p203 = pneg %p82
        %p204 = pneg %p79
        %p205 = pneg %p103
        %p206 = pneg %p100
        %p207 = pneg %p124
        %p208 = pneg %p121
        %p209 = pneg %p150
        %p210 = pneg %p147
        %s211 = sand.u32 %s137, 1
        %s212 = scalar_lea.sflag [#allocation3], %s211
        %s213 = sand.u32 %s137, 1
        %s214 = smul.addr %s213, 8
        %s215 = scalar_lea.vmem [#allocation2], %s214
        %p216 = scmp.lt.s32.totalorder %s19, 1
        %s217 = scalar_select %p216, %s19, 1
        %s218 = smul.addr %s217, 8
        %s219 = scalar_lea.vmem %s0, %s218
        %v221 = vld [vmem:[%s219] sm:$0xff]
        %v222 = vpack.c.bf16 %v221, %v221
        %v223 = vld [vmem:[%s1] sm:$0xff]
        %v224 = vld [vmem:[%s1 + $0x8] sm:$0xf]
        %v225 = vld [vmem:[%s1 + $0xc] sm:$0xff]
        %v226 = vld [vmem:[%s1 + $0x14] sm:$0xf]
        %v227 = vld [vmem:[%s1 + $0x18] sm:$0xff]
        %v228 = vld [vmem:[%s1 + $0x20] sm:$0xf]
        %v229 = vld [vmem:[%s1 + $0x24] sm:$0xff]
        %v230 = vld [vmem:[%s1 + $0x2c] sm:$0xf]
        %v231 = vld [vmem:[%s1 + $0x30] sm:$0xff]
        %v232 = vld [vmem:[%s1 + $0x38] sm:$0xf]
        %v233 = vld [vmem:[%s1 + $0x3c] sm:$0xff]
        %v234 = vld [vmem:[%s1 + $0x44] sm:$0xf]
        %v235 = vld [vmem:[%s1 + $0x48] sm:$0xff]
        %v236 = vld [vmem:[%s1 + $0x50] sm:$0xf]
        %v237 = vld [vmem:[%s1 + $0x54] sm:$0xff]
        %v238 = vld [vmem:[%s1 + $0x5c] sm:$0xf]
        %v239 = vld [vmem:[%s2] sm:$0x7]
        %v241 = vlaneseq
        %v242 = vshrl.u32 %v241, 7
        %v243 = vsub.s32 0, %v242
        %v244 = vrot.slane %v239, %v243
        %v245 = vlaneseq
        %v246 = vshrl.u32 %v245, 7
        %v247 = vsub.s32 1, %v246
        %v248 = vrot.slane %v239, %v247
        %v249 = vlaneseq
        %v250 = vshrl.u32 %v249, 7
        %v251 = vsub.s32 2, %v250
        %v252 = vrot.slane %v239, %v251
        %v272 = vunpack.c.l.b16 %v223
        %v273 = vunpack.c.h.b16 %v223
        %v274 = vunpack.c.l.b16 %v224
        %v275 = vunpack.c.l.b16 %v225
        %v276 = vunpack.c.h.b16 %v225
        %v277 = vunpack.c.l.b16 %v226
        %v278 = vunpack.c.l.b16 %v227
        %v279 = vunpack.c.h.b16 %v227
        %v280 = vunpack.c.l.b16 %v228
        %v281 = vunpack.c.l.b16 %v229
        %v282 = vunpack.c.h.b16 %v229
        %v283 = vunpack.c.l.b16 %v230
        %v284 = vunpack.c.l.b16 %v231
        %v285 = vunpack.c.h.b16 %v231
        %v286 = vunpack.c.l.b16 %v232
        %v287 = vunpack.c.l.b16 %v233
        %v288 = vunpack.c.h.b16 %v233
        %v289 = vunpack.c.l.b16 %v234
        %v290 = vunpack.c.l.b16 %v235
        %v291 = vunpack.c.h.b16 %v235
        %v292 = vunpack.c.l.b16 %v236
        %v293 = vunpack.c.l.b16 %v237
        %v294 = vunpack.c.h.b16 %v237
        %v295 = vunpack.c.l.b16 %v238
        %v296 = vpack.c.b16 %v275, %v272
        %v297 = vpack.c.b16 %v276, %v273
        %v298 = vpack.c.b16 %v277, %v274
        %v299 = vpack.c.b16 %v281, %v278
        %v300 = vpack.c.b16 %v282, %v279
        %v301 = vpack.c.b16 %v283, %v280
        %v302 = vpack.c.b16 %v287, %v284
        %v303 = vpack.c.b16 %v288, %v285
        %v304 = vpack.c.b16 %v289, %v286
        %v305 = vpack.c.b16 %v293, %v290
        %v306 = vpack.c.b16 %v294, %v291
        %v307 = vpack.c.b16 %v295, %v292
        %vm320 = vcmask 523264
        %v322 = vsel %vm320, %v222, 0
        %324 = vmatprep.subr.bf16.mxu0 %v297
        %325 = vmatpush1.bf16.msra.mxu0 %v296
        %326 = vmatprep.subr.bf16.mxu0 %v300
        %327 = vmatpush1.bf16.msra.mxu0 %v299
        %328 = vmatprep.subr.bf16.mxu0 %v303
        %329 = vmatpush1.bf16.msra.mxu0 %v302
        %330 = vmatprep.subr.bf16.mxu0 %v306
        %331 = vmatpush1.bf16.msra.mxu0 %v305
        %332 = vmatprep.subr.bf16.mxu0 0
        %333 = vmatpush1.bf16.msra.mxu0 0
        %334 = vmatprep.subr.bf16.mxu0 0
        %335 = vmatpush1.bf16.msra.mxu0 0
        %336 = vmatprep.subr.bf16.mxu0 0
        %337 = vmatpush1.bf16.msra.mxu0 0
        %338 = vmatprep.subr.bf16.mxu0 0
        %339 = vmatpush1.bf16.msra.mxu0 0
        %340 = vmatprep.subr.bf16.mxu0 0
        %341 = vmatpush1.bf16.msra.mxu0 0
        %342 = vmatprep.subr.bf16.mxu0 0
        %343 = vmatpush1.bf16.msra.mxu0 0
        %344 = vmatprep.subr.bf16.mxu0 0
        %345 = vmatpush1.bf16.msra.mxu0 0
        %346 = vmatprep.subr.bf16.mxu0 0
        %347 = vmatpush1.bf16.msra.mxu0 0
        %348 = vmatprep.subr.bf16.mxu0 0
        %349 = vmatpush1.bf16.msra.mxu0 0
        %350 = vmatprep.subr.bf16.mxu0 0
        %351 = vmatpush1.bf16.msra.mxu0 0
        %352 = vmatprep.subr.bf16.mxu0 0
        %353 = vmatpush1.bf16.msra.mxu0 0
        %354 = vmatprep.subr.bf16.mxu0 0
        %355 = vmatpush1.bf16.msra.mxu0 0
        %356 = vmatprep.mubr.bf16.mxu0 0
        %357 = vmatmul.mubr.bf16.gmra.mrb[0].mxu0 %v322
        %v358 = vpop.f32.mrb[0].mxu0
        %v359 = vadd.f32 %v244, %v358
        %v360 = vpop.f32.mrb[0].mxu0
        %v361 = vadd.f32 %v248, %v360
        %v362 = vpop.f32.mrb[0].mxu0
        %v363 = vpop.f32.mrb[0].mxu0
        %364 = vdwg.mxu0
        %365 = vmatprep.subr.bf16.mxu0 0
        %366 = vmatpush1.bf16.msra.mxu0 %v298
        %367 = vmatprep.subr.bf16.mxu0 0
        %368 = vmatpush1.bf16.msra.mxu0 %v301
        %369 = vmatprep.subr.bf16.mxu0 0
        %370 = vmatpush1.bf16.msra.mxu0 %v304
        %371 = vmatprep.subr.bf16.mxu0 0
        %372 = vmatpush1.bf16.msra.mxu0 %v307
        %373 = vmatprep.subr.bf16.mxu0 0
        %374 = vmatpush1.bf16.msra.mxu0 0
        %375 = vmatprep.subr.bf16.mxu0 0
        %376 = vmatpush1.bf16.msra.mxu0 0
        %377 = vmatprep.subr.bf16.mxu0 0
        %378 = vmatpush1.bf16.msra.mxu0 0
        %379 = vmatprep.subr.bf16.mxu0 0
        %380 = vmatpush1.bf16.msra.mxu0 0
        %381 = vmatprep.subr.bf16.mxu0 0
        %382 = vmatpush1.bf16.msra.mxu0 0
        %383 = vmatprep.subr.bf16.mxu0 0
        %384 = vmatpush1.bf16.msra.mxu0 0
        %385 = vmatprep.subr.bf16.mxu0 0
        %386 = vmatpush1.bf16.msra.mxu0 0
        %387 = vmatprep.subr.bf16.mxu0 0
        %388 = vmatpush1.bf16.msra.mxu0 0
        %389 = vmatprep.subr.bf16.mxu0 0
        %390 = vmatpush1.bf16.msra.mxu0 0
        %391 = vmatprep.subr.bf16.mxu0 0
        %392 = vmatpush1.bf16.msra.mxu0 0
        %393 = vmatprep.subr.bf16.mxu0 0
        %394 = vmatpush1.bf16.msra.mxu0 0
        %395 = vmatprep.subr.bf16.mxu0 0
        %396 = vmatpush1.bf16.msra.mxu0 0
        %397 = vmatprep.mubr.bf16.mxu0 0
        %398 = vmatmul.mubr.bf16.gmra.mrb[0].mxu0 %v322
        %v399 = vpop.f32.mrb[0].mxu0
        %v400 = vadd.f32 %v252, %v399
        %v401 = vpop.f32.mrb[0].mxu0
        %v402 = vpop.f32.mrb[0].mxu0
        %v403 = vpop.f32.mrb[0].mxu0
        %404 = vdwg.mxu0
        %v405 = vmax.f32 %v359, 0.0
        %v406 = vmax.f32 %v361, 0.0
        %v407 = vmax.f32 %v400, 0.0
        %v408 = vpack.c.bf16 %v405, %v405
        %v409 = vpack.c.bf16 %v406, %v406
        %v410 = vpack.c.bf16 %v407, %v407
        %v411 = vld [vmem:[%s3] sm:$0xf]
        %v412 = vld [vmem:[%s3 + $0x4] sm:$0xf]
        %v413 = vld [vmem:[%s3 + $0x8] sm:$0xf]
        %v414 = vld [vmem:[%s3 + $0xc] sm:$0xf]
        %v415 = vld [vmem:[%s3 + $0x10] sm:$0xf]
        %v416 = vld [vmem:[%s3 + $0x14] sm:$0xf]
        %v417 = vld [vmem:[%s3 + $0x18] sm:$0xf]
        %v418 = vld [vmem:[%s3 + $0x1c] sm:$0xf]
        %v419 = vld [vmem:[%s3 + $0x20] sm:$0xf]
        %v420 = vld [vmem:[%s3 + $0x24] sm:$0xf]
        %v421 = vld [vmem:[%s3 + $0x28] sm:$0xf]
        %v422 = vld [vmem:[%s3 + $0x2c] sm:$0xf]
        %v423 = vld [vmem:[%s3 + $0x30] sm:$0xf]
        %v424 = vld [vmem:[%s3 + $0x34] sm:$0xf]
        %v425 = vld [vmem:[%s3 + $0x38] sm:$0xf]
        %v426 = vld [vmem:[%s3 + $0x3c] sm:$0xf]
        %v427 = vld [vmem:[%s3 + $0x40] sm:$0xf]
        %v428 = vld [vmem:[%s3 + $0x44] sm:$0xf]
        %v429 = vld [vmem:[%s3 + $0x48] sm:$0xf]
        %v430 = vld [vmem:[%s3 + $0x4c] sm:$0xf]
        %v431 = vld [vmem:[%s3 + $0x50] sm:$0xf]
        %v432 = vld [vmem:[%s3 + $0x54] sm:$0xf]
        %v433 = vld [vmem:[%s3 + $0x58] sm:$0xf]
        %v434 = vld [vmem:[%s3 + $0x5c] sm:$0xf]
        %v435 = vld [vmem:[%s3 + $0x60] sm:$0xf]
        %v436 = vld [vmem:[%s3 + $0x64] sm:$0xf]
        %v437 = vld [vmem:[%s3 + $0x68] sm:$0xf]
        %v438 = vld [vmem:[%s3 + $0x6c] sm:$0xf]
        %v439 = vld [vmem:[%s3 + $0x70] sm:$0xf]
        %v440 = vld [vmem:[%s3 + $0x74] sm:$0xf]
        %v441 = vld [vmem:[%s3 + $0x78] sm:$0xf]
        %v442 = vld [vmem:[%s3 + $0x7c] sm:$0xf]
        %v443 = vld [vmem:[%s3 + $0x80] sm:$0xf]
        %v444 = vld [vmem:[%s3 + $0x84] sm:$0xf]
        %v445 = vld [vmem:[%s3 + $0x88] sm:$0xf]
        %v446 = vld [vmem:[%s3 + $0x8c] sm:$0xf]
        %v447 = vld [vmem:[%s3 + $0x90] sm:$0xf]
        %v448 = vld [vmem:[%s3 + $0x94] sm:$0xf]
        %v449 = vld [vmem:[%s3 + $0x98] sm:$0xf]
        %v450 = vld [vmem:[%s3 + $0x9c] sm:$0xf]
        %v451 = vld [vmem:[%s3 + $0xa0] sm:$0xf]
        %v452 = vld [vmem:[%s3 + $0xa4] sm:$0xf]
        %v453 = vld [vmem:[%s3 + $0xa8] sm:$0xf]
        %v454 = vld [vmem:[%s3 + $0xac] sm:$0xf]
        %v455 = vld [vmem:[%s3 + $0xb0] sm:$0xf]
        %v456 = vld [vmem:[%s3 + $0xb4] sm:$0xf]
        %v457 = vld [vmem:[%s3 + $0xb8] sm:$0xf]
        %v458 = vld [vmem:[%s3 + $0xbc] sm:$0xf]
        %v459 = vld [vmem:[%s4] sm:$0x1]
        %v461 = vlaneseq
        %v462 = vshrl.u32 %v461, 7
        %v463 = vsub.s32 0, %v462
        %v464 = vrot.slane %v459, %v463
        %v514 = vunpack.c.l.b16 %v411
        %v515 = vunpack.c.l.b16 %v412
        %v516 = vunpack.c.l.b16 %v413
        %v517 = vunpack.c.l.b16 %v414
        %v518 = vunpack.c.l.b16 %v415
        %v519 = vunpack.c.l.b16 %v416
        %v520 = vunpack.c.l.b16 %v417
        %v521 = vunpack.c.l.b16 %v418
        %v522 = vunpack.c.l.b16 %v419
        %v523 = vunpack.c.l.b16 %v420
        %v524 = vunpack.c.l.b16 %v421
        %v525 = vunpack.c.l.b16 %v422
        %v526 = vunpack.c.l.b16 %v423
        %v527 = vunpack.c.l.b16 %v424
        %v528 = vunpack.c.l.b16 %v425
        %v529 = vunpack.c.l.b16 %v426
        %v530 = vunpack.c.l.b16 %v427
        %v531 = vunpack.c.l.b16 %v428
        %v532 = vunpack.c.l.b16 %v429
        %v533 = vunpack.c.l.b16 %v430
        %v534 = vunpack.c.l.b16 %v431
        %v535 = vunpack.c.l.b16 %v432
        %v536 = vunpack.c.l.b16 %v433
        %v537 = vunpack.c.l.b16 %v434
        %v538 = vunpack.c.l.b16 %v435
        %v539 = vunpack.c.l.b16 %v436
        %v540 = vunpack.c.l.b16 %v437
        %v541 = vunpack.c.l.b16 %v438
        %v542 = vunpack.c.l.b16 %v439
        %v543 = vunpack.c.l.b16 %v440
        %v544 = vunpack.c.l.b16 %v441
        %v545 = vunpack.c.l.b16 %v442
        %v546 = vunpack.c.l.b16 %v443
        %v547 = vunpack.c.l.b16 %v444
        %v548 = vunpack.c.l.b16 %v445
        %v549 = vunpack.c.l.b16 %v446
        %v550 = vunpack.c.l.b16 %v447
        %v551 = vunpack.c.l.b16 %v448
        %v552 = vunpack.c.l.b16 %v449
        %v553 = vunpack.c.l.b16 %v450
        %v554 = vunpack.c.l.b16 %v451
        %v555 = vunpack.c.l.b16 %v452
        %v556 = vunpack.c.l.b16 %v453
        %v557 = vunpack.c.l.b16 %v454
        %v558 = vunpack.c.l.b16 %v455
        %v559 = vunpack.c.l.b16 %v456
        %v560 = vunpack.c.l.b16 %v457
        %v561 = vunpack.c.l.b16 %v458
        %v562 = vpack.c.b16 %v515, %v514
        %v563 = vpack.c.b16 %v517, %v516
        %v564 = vpack.c.b16 %v519, %v518
        %v565 = vpack.c.b16 %v521, %v520
        %v566 = vpack.c.b16 %v523, %v522
        %v567 = vpack.c.b16 %v525, %v524
        %v568 = vpack.c.b16 %v527, %v526
        %v569 = vpack.c.b16 %v529, %v528
        %v570 = vpack.c.b16 %v531, %v530
        %v571 = vpack.c.b16 %v533, %v532
        %v572 = vpack.c.b16 %v535, %v534
        %v573 = vpack.c.b16 %v537, %v536
        %v574 = vpack.c.b16 %v539, %v538
        %v575 = vpack.c.b16 %v541, %v540
        %v576 = vpack.c.b16 %v543, %v542
        %v577 = vpack.c.b16 %v545, %v544
        %v578 = vpack.c.b16 %v547, %v546
        %v579 = vpack.c.b16 %v549, %v548
        %v580 = vpack.c.b16 %v551, %v550
        %v581 = vpack.c.b16 %v553, %v552
        %v582 = vpack.c.b16 %v555, %v554
        %v583 = vpack.c.b16 %v557, %v556
        %v584 = vpack.c.b16 %v559, %v558
        %v585 = vpack.c.b16 %v561, %v560
        %610 = vmatprep.subr.bf16.mxu0 0
        %611 = vmatpush1.bf16.msra.mxu0 %v562
        %612 = vmatprep.subr.bf16.mxu0 0
        %613 = vmatpush1.bf16.msra.mxu0 %v563
        %614 = vmatprep.subr.bf16.mxu0 0
        %615 = vmatpush1.bf16.msra.mxu0 %v564
        %616 = vmatprep.subr.bf16.mxu0 0
        %617 = vmatpush1.bf16.msra.mxu0 %v565
        %618 = vmatprep.subr.bf16.mxu0 0
        %619 = vmatpush1.bf16.msra.mxu0 %v566
        %620 = vmatprep.subr.bf16.mxu0 0
        %621 = vmatpush1.bf16.msra.mxu0 %v567
        %622 = vmatprep.subr.bf16.mxu0 0
        %623 = vmatpush1.bf16.msra.mxu0 %v568
        %624 = vmatprep.subr.bf16.mxu0 0
        %625 = vmatpush1.bf16.msra.mxu0 %v569
        %626 = vmatprep.subr.bf16.mxu0 0
        %627 = vmatpush1.bf16.msra.mxu0 %v570
        %628 = vmatprep.subr.bf16.mxu0 0
        %629 = vmatpush1.bf16.msra.mxu0 %v571
        %630 = vmatprep.subr.bf16.mxu0 0
        %631 = vmatpush1.bf16.msra.mxu0 %v572
        %632 = vmatprep.subr.bf16.mxu0 0
        %633 = vmatpush1.bf16.msra.mxu0 %v573
        %634 = vmatprep.subr.bf16.mxu0 0
        %635 = vmatpush1.bf16.msra.mxu0 %v574
        %636 = vmatprep.subr.bf16.mxu0 0
        %637 = vmatpush1.bf16.msra.mxu0 %v575
        %638 = vmatprep.subr.bf16.mxu0 0
        %639 = vmatpush1.bf16.msra.mxu0 %v576
        %640 = vmatprep.subr.bf16.mxu0 0
        %641 = vmatpush1.bf16.msra.mxu0 %v577
        %642 = vmatprep.mubr.bf16.mxu0 %v409
        %643 = vmatmul.mubr.bf16.gmra.mrb[0].mxu0 %v408
        %v644 = vpop.f32.mrb[0].mxu0
        %v645 = vadd.f32 %v464, %v644
        %v646 = vpop.f32.mrb[0].mxu0
        %v647 = vpop.f32.mrb[0].mxu0
        %v648 = vpop.f32.mrb[0].mxu0
        %649 = vdwg.mxu0
        %650 = vmatprep.subr.bf16.mxu0 0
        %651 = vmatpush1.bf16.msra.mxu0 %v578
        %652 = vmatprep.subr.bf16.mxu0 0
        %653 = vmatpush1.bf16.msra.mxu0 %v579
        %654 = vmatprep.subr.bf16.mxu0 0
        %655 = vmatpush1.bf16.msra.mxu0 %v580
        %656 = vmatprep.subr.bf16.mxu0 0
        %657 = vmatpush1.bf16.msra.mxu0 %v581
        %658 = vmatprep.subr.bf16.mxu0 0
        %659 = vmatpush1.bf16.msra.mxu0 %v582
        %660 = vmatprep.subr.bf16.mxu0 0
        %661 = vmatpush1.bf16.msra.mxu0 %v583
        %662 = vmatprep.subr.bf16.mxu0 0
        %663 = vmatpush1.bf16.msra.mxu0 %v584
        %664 = vmatprep.subr.bf16.mxu0 0
        %665 = vmatpush1.bf16.msra.mxu0 %v585
        %666 = vmatprep.subr.bf16.mxu0 0
        %667 = vmatpush1.bf16.msra.mxu0 0
        %668 = vmatprep.subr.bf16.mxu0 0
        %669 = vmatpush1.bf16.msra.mxu0 0
        %670 = vmatprep.subr.bf16.mxu0 0
        %671 = vmatpush1.bf16.msra.mxu0 0
        %672 = vmatprep.subr.bf16.mxu0 0
        %673 = vmatpush1.bf16.msra.mxu0 0
        %674 = vmatprep.subr.bf16.mxu0 0
        %675 = vmatpush1.bf16.msra.mxu0 0
        %676 = vmatprep.subr.bf16.mxu0 0
        %677 = vmatpush1.bf16.msra.mxu0 0
        %678 = vmatprep.subr.bf16.mxu0 0
        %679 = vmatpush1.bf16.msra.mxu0 0
        %680 = vmatprep.subr.bf16.mxu0 0
        %681 = vmatpush1.bf16.msra.mxu0 0
        %682 = vmatprep.mubr.bf16.mxu0 0
        %683 = vmatmul.mubr.bf16.gmra.mrb[0].mxu0 %v410
        %v684 = vpop.f32.mrb[0].mxu0
        %v685 = vadd.f32 %v645, %v684
        %v686 = vpop.f32.mrb[0].mxu0
        %v687 = vpop.f32.mrb[0].mxu0
        %v688 = vpop.f32.mrb[0].mxu0
        %689 = vdwg.mxu0
        %690 = vst.msk [vmem:[%s215] sm:$0xff] %vm320, %v685
        %s691 = sand.u32 %s137, 1
        %s692 = scalar_lea.sflag [#allocation3], %s691
        %s693 = sand.u32 %s137, 1
        %s694 = smul.addr %s693, 8
        %s695 = scalar_lea.vmem [#allocation2], %s694
        // Predicated region
        $region41: #{tpu_custom_call.1} parent=39 // pred_check
          %p696 = pneg %p147
        $region42: #{tpu_custom_call.1} parent=39 // pred_check_branch
          %698 = sbr.rel (%p696) target = $region44
        $region43: #{tpu_custom_call.1} parent=39 // pred_region
          %s700 = ssub.s32 128, 128
          %701 = vsyncadd %s692, %s700
          %s702 = smul.addr %s19, 128
          %s703 = scalar_lea.hbm %s5, %s702
          %s705 = sshll.u32 %s695, 4
          %s706 = int_to_ptr.vmem [resolvable:$true] %s705
          %708 = dma.vmem_to_hbm [thread:$0]  %s706, 128, %s703, %s692
        $region44: #{tpu_custom_call.1} parent=39 // pred_fallthru
          _
      $region40: #{tpu_custom_call.1} parent=5 // pred_fallthru
        _
      %p709 = scmp.le.s32.totalorder 2, %s14
      // Predicated region
      $region45: #{tpu_custom_call.1} parent=5 // pred_check
        %p710 = pneg %p709
      $region46: #{tpu_custom_call.1} parent=5 // pred_check_branch
        %712 = sbr.rel (%p710) target = $region48
      $region47: #{tpu_custom_call.1} parent=5 // pred_region
        %s713 = ssub.s32 %s14, 2
        // Predicated region
        $region49: #{tpu_custom_call.1} parent=47 // pred_check
          %p714 = pneg %p153
        $region50: #{tpu_custom_call.1} parent=47 // pred_check_branch
          %716 = sbr.rel (%p714) target = $region52
        $region51: #{tpu_custom_call.1} parent=47 // pred_region
          %s717 = sand.u32 %s138, 1
          %s718 = scalar_lea.sflag [#allocation3], %s717
          %s719 = sand.u32 %s138, 1
          %s720 = smul.addr %s719, 8
          %s721 = scalar_lea.vmem [#allocation2], %s720
          %722 = dma.done %s718, 128
        $region52: #{tpu_custom_call.1} parent=47 // pred_fallthru
          _
      $region48: #{tpu_custom_call.1} parent=5 // pred_fallthru
        _
    $region6: #{tpu_custom_call.1} parent=1 // loop_footer
      %s18 = sadd.s32 1, %s14
    $region7: #{tpu_custom_call.1} parent=1 // loop_footer_branch
      %13 = sbr.rel target = $region3
    $region8: #{tpu_custom_call.1} parent=1 // loop_exit
      _
    %723 = vsyncpa [#allocation3], 1
    %s724 = scalar_lea.sflag [#allocation3], 1
    %725 = vsyncpa %s724, 1

</llo_original>
